<compile_context>
chip_gen: v6e
topology: v6e:2x2x1
jax: 0.10.0
libtpu: 0.0.40
codegen_flags: <defaults>
</compile_context>

<pallas_src>
import functools

import jax
import jax.numpy as jnp
from jax.experimental import pallas as pl
from jax.experimental.pallas import tpu as pltpu

_NEG_INF = -1e30   # finite "minus infinity" for the temporal-max mask
_LANE = 128


def _round_up(x, m):
    return (x + m - 1) // m * m


def _textcnn_kernel(emb_ref, w_comb_ref, addmask_ref, fc_w_ref, fc_b_ref,
                    out_ref):
    """All shapes are static, derived from the BlockSpecs.

    emb_ref:     (tb*L_pad, E)        bf16   flattened embedding tile
    w_comb_ref:  (w_max, E, c_pad)    bf16   per-offset combined conv weights
    addmask_ref: (L_pad, c_pad)       f32    conv bias fused with -inf tail mask
    fc_w_ref:    (c_pad, n_pad)       bf16
    fc_b_ref:    (1, n_pad)           f32
    out_ref:     (tb, n_pad)          f32
    """
    x = emb_ref[...]                                   # (rows, E) bf16
    rows = x.shape[0]
    w_max = w_comb_ref.shape[0]
    l_pad, c_pad = addmask_ref.shape
    tb = rows // l_pad

    # Conv as w_max accumulated matmuls: conv[r] = sum_i x[r+i] @ W_i.
    # Each partial (x @ W_i) is rolled "up" by i rows (f32 sublane roll on the
    # XLU); wrapped rows only land on time steps that the -inf addmask kills.
    acc = jnp.dot(x, w_comb_ref[0], preferred_element_type=jnp.float32)
    for i in range(1, w_max):
        part = jnp.dot(x, w_comb_ref[i], preferred_element_type=jnp.float32)
        acc = acc + pltpu.roll(part, shift=rows - i, axis=0)

    # Fused bias + (-inf for invalid tail positions), then temporal max.
    conv = acc.reshape(tb, l_pad, c_pad) + addmask_ref[...][None, :, :]
    pooled = jnp.max(conv, axis=1)                     # (tb, c_pad) f32

    # TODO(synk): dropout is identity at inference (eval) time; no mask applied.
    logits = jnp.dot(pooled.astype(jnp.bfloat16), fc_w_ref[...],
                     preferred_element_type=jnp.float32) + fc_b_ref[...]
    out_ref[...] = logits.astype(out_ref.dtype)


def _pick_batch_tile(B, L_pad, E, c_pad, n_pad, w_max):
    """Largest batch tile (multiple of 8, <=1024) whose working set fits a
    conservative VMEM budget (sized for v7x's smaller VMEM; v5e/v6e have slack).
    """
    resident = (w_max * E * c_pad * 2        # conv weights (bf16)
                + L_pad * c_pad * 4          # bias + mask   (f32)
                + c_pad * n_pad * 2          # fc weight     (bf16)
                + n_pad * 4)                 # fc bias       (f32)
    # per-sample: double-buffered bf16 emb rows + f32 partial/rolled/accumulator
    # conv intermediates + double-buffered f32 output row.
    per_sample = L_pad * (2 * E * 2 + 4 * c_pad * 4) + 2 * n_pad * 4
    budget = 16 * 1024 * 1024
    avail = max(budget - resident, 8 * per_sample)
    tb = (avail // per_sample) // 8 * 8
    return int(max(8, min(1024, tb)))


@functools.partial(jax.jit, static_argnames=("kernel_wins",))
def textcnn_forward(tokens, embed_table, conv_ws, conv_bs, fc_w, fc_b,
                    kernel_wins):
    """
    tokens:      (B, L) int32
    embed_table: (V, E) f32
    conv_ws[k]:  (C, 1, w_k, E) f32  -- PyTorch Conv2d(1, C, (w_k, E)) weight
    conv_bs[k]:  (C,) f32
    fc_w:        (num_class, K*C) f32  -- PyTorch Linear weight
    fc_b:        (num_class,) f32
    returns:     (B, num_class) f32 logits
    """
    kernel_wins = tuple(int(w) for w in kernel_wins)
    B, L = tokens.shape
    _, E = embed_table.shape
    C = conv_ws[0].shape[0]
    K = len(kernel_wins)
    num_class = fc_b.shape[0]
    w_max = max(kernel_wins)

    if w_max > L:
        # PyTorch's conv/max_pool1d would raise on an empty window; mirror that.
        raise ValueError(f"kernel width {w_max} exceeds sequence length {L}")

    L_pad = _round_up(L, 8)                 # keep sublane-dim reshapes free
    c_pad = _round_up(K * C, _LANE)
    n_pad = _round_up(num_class, _LANE)

    # ---- Parameter repacking (tiny; would be pre-packed once in production) ----
    # Per-offset combined conv weight (w_max, E, c_pad), bf16 for the MXU.
    w_comb = jnp.zeros((w_max, E, c_pad), jnp.float32)
    for k, (w, wk) in enumerate(zip(kernel_wins, conv_ws)):
        # (C, 1, w, E) -> (w, E, C); offsets >= w_k stay zero for kernel k.
        wk_t = jnp.transpose(wk[:, 0, :, :], (1, 2, 0))
        w_comb = w_comb.at[:w, :, k * C:(k + 1) * C].set(wk_t)
    w_comb = w_comb.astype(jnp.bfloat16)

    # Fused bias + validity mask, shape (L_pad, c_pad): valid time steps get the
    # conv bias; the invalid tail (t > L - w_k) gets -inf; padded columns get 0.
    t_idx = jnp.arange(L_pad)[:, None]
    mask_cols = []
    for k, w in enumerate(kernel_wins):
        t_out = L - w + 1
        mask_cols.append(jnp.where(t_idx < t_out, conv_bs[k][None, :], _NEG_INF))
    addmask = jnp.concatenate(mask_cols, axis=1)                  # (L_pad, K*C)
    addmask = jnp.pad(addmask, ((0, 0), (0, c_pad - K * C)))      # (L_pad, c_pad)

    # Padded FC params: zero rows/cols so padded channels/classes cannot leak.
    fc_w_p = jnp.zeros((c_pad, n_pad), jnp.float32)
    fc_w_p = fc_w_p.at[: K * C, :num_class].set(fc_w.T).astype(jnp.bfloat16)
    fc_b_p = jnp.zeros((1, n_pad), jnp.float32).at[0, :num_class].set(fc_b)

    # ---- Batch tiling ----
    tb = _pick_batch_tile(B, L_pad, E, c_pad, n_pad, w_max)
    if B >= 16:
        # Keep >= 2 grid steps so both v7x TensorCores get batch tiles.
        tb = min(tb, _round_up((B + 1) // 2, 8))
    else:
        tb = min(tb, _round_up(B, 8))
    B_pad = _round_up(B, tb)
    grid = (B_pad // tb,)

    # ---- Embedding gather (JAX glue), bf16 to halve the HBM round trip ----
    # TODO(synk): fuse the gather into the kernel (token scalar-prefetch + DMA
    # gather from an ANY-space table); at E=32 bf16 per-row DMAs are too small
    # to beat XLA's native gather, so the round trip is kept for now.
    tokens_p = jnp.pad(tokens, ((0, B_pad - B), (0, L_pad - L)))
    emb = jnp.take(embed_table.astype(jnp.bfloat16), tokens_p, axis=0)
    emb_flat = emb.reshape(B_pad * L_pad, E)          # layout-level flatten

    flops = 2 * B_pad * L_pad * w_max * E * c_pad + 2 * B_pad * c_pad * n_pad
    bytes_accessed = (B_pad * L_pad * E * 2 + w_max * E * c_pad * 2
                      + L_pad * c_pad * 4 + c_pad * n_pad * 2 + n_pad * 4
                      + B_pad * n_pad * 4)
    cost = pl.CostEstimate(flops=int(flops), transcendentals=0,
                           bytes_accessed=int(bytes_accessed))

    out_padded = pl.pallas_call(
        _textcnn_kernel,
        out_shape=jax.ShapeDtypeStruct((B_pad, n_pad), jnp.float32),
        grid=grid,
        in_specs=[
            pl.BlockSpec((tb * L_pad, E), lambda i: (i, 0)),        # emb tile
            pl.BlockSpec((w_max, E, c_pad), lambda i: (0, 0, 0)),   # conv weight
            pl.BlockSpec((L_pad, c_pad), lambda i: (0, 0)),         # bias+mask
            pl.BlockSpec((c_pad, n_pad), lambda i: (0, 0)),         # fc weight
            pl.BlockSpec((1, n_pad), lambda i: (0, 0)),             # fc bias
        ],
        out_specs=pl.BlockSpec((tb, n_pad), lambda i: (i, 0)),
        compiler_params=pltpu.CompilerParams(
            dimension_semantics=("parallel",),
            vmem_limit_bytes=48 * 1024 * 1024),
        cost_estimate=cost,
    )(emb_flat, w_comb, addmask, fc_w_p, fc_b_p)

    return out_padded[:B, :num_class]


def _reference_forward(tokens, embed_table, conv_ws, conv_bs, fc_w, fc_b,
                       kernel_wins):
    """Pure-JAX mirror of the PyTorch forward (eval mode), using the same
    bf16-quantized embedding / conv / FC weights the kernel consumes."""
    emb = jnp.take(embed_table.astype(jnp.bfloat16), tokens,
                   axis=0).astype(jnp.float32)                    # (B, L, E)
    B, L, _ = emb.shape
    pooled = []
    for k, w in enumerate(kernel_wins):
        wk = conv_ws[k].astype(jnp.bfloat16).astype(jnp.float32)  # (C, 1, w, E)
        C = wk.shape[0]
        t_out = L - w + 1
        acc = jnp.zeros((B, t_out, C), jnp.float32)
        for i in range(w):
            acc = acc + jnp.einsum("bte,ce->btc",
                                   emb[:, i:i + t_out, :], wk[:, 0, i, :])
        conv = acc + conv_bs[k][None, None, :]                    # (B, T, C)
        pooled.append(jnp.max(conv, axis=1))                      # (B, C)
    feat = jnp.concatenate(pooled, axis=-1).astype(jnp.bfloat16)  # (B, K*C)
    fc_w_q = fc_w.astype(jnp.bfloat16)
    return jnp.dot(feat, fc_w_q.T,
                   preferred_element_type=jnp.float32) + fc_b[None, :]


if __name__ == "__main__":
    # Small deterministic config.
    vocab_size = 50
    emb_dim = 32
    batch = 8
    seq_len = 16
    dim_channel = 8
    kernel_wins = (3, 4, 5)
    num_class = 4

    key = jax.random.PRNGKey(0)
    keys = jax.random.split(key, 4 + 2 * len(kernel_wins))

    tokens = jax.random.randint(keys[0], (batch, seq_len), 0, vocab_size,
                                dtype=jnp.int32)
    embed_table = jax.random.normal(keys[1], (vocab_size, emb_dim),
                                    dtype=jnp.float32) * 0.1

    conv_ws, conv_bs = [], []
    for k, w in enumerate(kernel_wins):
        conv_ws.append(jax.random.normal(
            keys[2 + 2 * k], (dim_channel, 1, w, emb_dim),
            dtype=jnp.float32) * 0.05)
        conv_bs.append(jax.random.normal(
            keys[3 + 2 * k], (dim_channel,), dtype=jnp.float32) * 0.01)

    fc_in = len(kernel_wins) * dim_channel
    fc_w = jax.random.normal(keys[-2], (num_class, fc_in),
                             dtype=jnp.float32) * 0.05
    fc_b = jax.random.normal(keys[-1], (num_class,), dtype=jnp.float32) * 0.01

    logits = textcnn_forward(tokens, embed_table, tuple(conv_ws), tuple(conv_bs),
                             fc_w, fc_b, kernel_wins)
    logits = jax.block_until_ready(logits)

    ref = _reference_forward(tokens, embed_table, conv_ws, conv_bs, fc_w, fc_b,
                             kernel_wins)
    assert logits.shape == (batch, num_class), logits.shape
    assert jnp.allclose(logits, ref, rtol=1e-2, atol=1e-2), (logits, ref)

    print("KERNEL_OK")
</pallas_src>

<mosaic_0001>
module attributes {stable_mosaic.version = 11 : i64} {
  func.func @_textcnn_kernel(%arg0: i32, %arg1: memref<128x32xbf16, #tpu.memory_space<vmem>>, %arg2: memref<5x32x128xbf16, #tpu.memory_space<vmem>>, %arg3: memref<16x128xf32, #tpu.memory_space<vmem>>, %arg4: memref<128x128xbf16, #tpu.memory_space<vmem>>, %arg5: memref<1x128xf32, #tpu.memory_space<vmem>>, %arg6: memref<8x128xf32, #tpu.memory_space<vmem>>) attributes {dimension_semantics = [#tpu.dimension_semantics<parallel>], iteration_bounds = array<i64: 1>, scalar_prefetch = 0 : i64, scratch_operands = 0 : i64, tpu.core_type = #tpu.core_type<tc>, window_params = [{transform_indices = @transform_0, window_bounds = array<i64: 128, 32>}, {pipeline_mode = #tpu.pipeline_mode<synchronous>, transform_indices = @transform_1, window_bounds = array<i64: 5, 32, 128>}, {pipeline_mode = #tpu.pipeline_mode<synchronous>, transform_indices = @transform_2, window_bounds = array<i64: 16, 128>}, {pipeline_mode = #tpu.pipeline_mode<synchronous>, transform_indices = @transform_3, window_bounds = array<i64: 128, 128>}, {pipeline_mode = #tpu.pipeline_mode<synchronous>, transform_indices = @transform_4, window_bounds = array<i64: 1, 128>}, {transform_indices = @transform_5, window_bounds = array<i64: 8, 128>}]} {
    %c0 = arith.constant 0 : index
    %c0_0 = arith.constant 0 : index
    %0 = vector.load %arg1[%c0, %c0_0] : memref<128x32xbf16, #tpu.memory_space<vmem>>, vector<128x32xbf16>
    %c0_1 = arith.constant 0 : index
    %c0_2 = arith.constant 0 : index
    %c0_3 = arith.constant 0 : index
    %1 = vector.load %arg2[%c0_1, %c0_2, %c0_3] : memref<5x32x128xbf16, #tpu.memory_space<vmem>>, vector<1x32x128xbf16>
    %2 = vector.shape_cast %1 : vector<1x32x128xbf16> to vector<32x128xbf16>
    %cst = arith.constant dense<0.000000e+00> : vector<128x128xf32>
    %3 = tpu.matmul %0, %2, %cst {dimension_numbers = #tpu.dot_dimension_numbers<[1], [0], [0], [1], [0, 0, 1, 1], [], []>} : vector<128x32xbf16>, vector<32x128xbf16>, vector<128x128xf32> -> vector<128x128xf32>
    %c1 = arith.constant 1 : index
    %c0_4 = arith.constant 0 : index
    %c0_5 = arith.constant 0 : index
    %4 = vector.load %arg2[%c1, %c0_4, %c0_5] : memref<5x32x128xbf16, #tpu.memory_space<vmem>>, vector<1x32x128xbf16>
    %5 = vector.shape_cast %4 : vector<1x32x128xbf16> to vector<32x128xbf16>
    %cst_6 = arith.constant dense<0.000000e+00> : vector<128x128xf32>
    %6 = tpu.matmul %0, %5, %cst_6 {dimension_numbers = #tpu.dot_dimension_numbers<[1], [0], [0], [1], [0, 0, 1, 1], [], []>} : vector<128x32xbf16>, vector<32x128xbf16>, vector<128x128xf32> -> vector<128x128xf32>
    %c127_i32 = arith.constant 127 : i32
    %7 = tpu.dynamic_rotate %6 by %c127_i32 dim 0 : vector<128x128xf32>, i32 -> vector<128x128xf32>
    %8 = arith.addf %3, %7 : vector<128x128xf32>
    %c2 = arith.constant 2 : index
    %c0_7 = arith.constant 0 : index
    %c0_8 = arith.constant 0 : index
    %9 = vector.load %arg2[%c2, %c0_7, %c0_8] : memref<5x32x128xbf16, #tpu.memory_space<vmem>>, vector<1x32x128xbf16>
    %10 = vector.shape_cast %9 : vector<1x32x128xbf16> to vector<32x128xbf16>
    %cst_9 = arith.constant dense<0.000000e+00> : vector<128x128xf32>
    %11 = tpu.matmul %0, %10, %cst_9 {dimension_numbers = #tpu.dot_dimension_numbers<[1], [0], [0], [1], [0, 0, 1, 1], [], []>} : vector<128x32xbf16>, vector<32x128xbf16>, vector<128x128xf32> -> vector<128x128xf32>
    %c126_i32 = arith.constant 126 : i32
    %12 = tpu.dynamic_rotate %11 by %c126_i32 dim 0 : vector<128x128xf32>, i32 -> vector<128x128xf32>
    %13 = arith.addf %8, %12 : vector<128x128xf32>
    %c3 = arith.constant 3 : index
    %c0_10 = arith.constant 0 : index
    %c0_11 = arith.constant 0 : index
    %14 = vector.load %arg2[%c3, %c0_10, %c0_11] : memref<5x32x128xbf16, #tpu.memory_space<vmem>>, vector<1x32x128xbf16>
    %15 = vector.shape_cast %14 : vector<1x32x128xbf16> to vector<32x128xbf16>
    %cst_12 = arith.constant dense<0.000000e+00> : vector<128x128xf32>
    %16 = tpu.matmul %0, %15, %cst_12 {dimension_numbers = #tpu.dot_dimension_numbers<[1], [0], [0], [1], [0, 0, 1, 1], [], []>} : vector<128x32xbf16>, vector<32x128xbf16>, vector<128x128xf32> -> vector<128x128xf32>
    %c125_i32 = arith.constant 125 : i32
    %17 = tpu.dynamic_rotate %16 by %c125_i32 dim 0 : vector<128x128xf32>, i32 -> vector<128x128xf32>
    %18 = arith.addf %13, %17 : vector<128x128xf32>
    %c4 = arith.constant 4 : index
    %c0_13 = arith.constant 0 : index
    %c0_14 = arith.constant 0 : index
    %19 = vector.load %arg2[%c4, %c0_13, %c0_14] : memref<5x32x128xbf16, #tpu.memory_space<vmem>>, vector<1x32x128xbf16>
    %20 = vector.shape_cast %19 : vector<1x32x128xbf16> to vector<32x128xbf16>
    %cst_15 = arith.constant dense<0.000000e+00> : vector<128x128xf32>
    %21 = tpu.matmul %0, %20, %cst_15 {dimension_numbers = #tpu.dot_dimension_numbers<[1], [0], [0], [1], [0, 0, 1, 1], [], []>} : vector<128x32xbf16>, vector<32x128xbf16>, vector<128x128xf32> -> vector<128x128xf32>
    %c124_i32 = arith.constant 124 : i32
    %22 = tpu.dynamic_rotate %21 by %c124_i32 dim 0 : vector<128x128xf32>, i32 -> vector<128x128xf32>
    %23 = arith.addf %18, %22 : vector<128x128xf32>
    %24 = vector.shape_cast %23 : vector<128x128xf32> to vector<8x16x128xf32>
    %c0_16 = arith.constant 0 : index
    %c0_17 = arith.constant 0 : index
    %25 = vector.load %arg3[%c0_16, %c0_17] : memref<16x128xf32, #tpu.memory_space<vmem>>, vector<16x128xf32>
    %26 = vector.shape_cast %25 : vector<16x128xf32> to vector<1x16x128xf32>
    %27 = vector.broadcast %26 : vector<1x16x128xf32> to vector<8x16x128xf32>
    %28 = arith.addf %24, %27 : vector<8x16x128xf32>
    %cst_18 = arith.constant dense<0xFF800000> : vector<8x128xf32>
    %29 = vector.multi_reduction <maximumf>, %28, %cst_18 [1] : vector<8x16x128xf32> to vector<8x128xf32>
    %30 = arith.truncf %29 : vector<8x128xf32> to vector<8x128xbf16>
    %c0_19 = arith.constant 0 : index
    %c0_20 = arith.constant 0 : index
    %31 = vector.load %arg4[%c0_19, %c0_20] : memref<128x128xbf16, #tpu.memory_space<vmem>>, vector<128x128xbf16>
    %cst_21 = arith.constant dense<0.000000e+00> : vector<8x128xf32>
    %32 = tpu.matmul %30, %31, %cst_21 {dimension_numbers = #tpu.dot_dimension_numbers<[1], [0], [0], [1], [0, 0, 1, 1], [], []>} : vector<8x128xbf16>, vector<128x128xbf16>, vector<8x128xf32> -> vector<8x128xf32>
    %c0_22 = arith.constant 0 : index
    %c0_23 = arith.constant 0 : index
    %33 = vector.load %arg5[%c0_22, %c0_23] : memref<1x128xf32, #tpu.memory_space<vmem>>, vector<1x128xf32>
    %34 = vector.broadcast %33 : vector<1x128xf32> to vector<8x128xf32>
    %35 = arith.addf %32, %34 : vector<8x128xf32>
    %c0_24 = arith.constant 0 : index
    %c0_25 = arith.constant 0 : index
    %36 = vector.load %arg6[%c0_24, %c0_25] : memref<8x128xf32, #tpu.memory_space<vmem>>, vector<8x128xf32>
    tpu.vector_store %arg6[%c0_24, %c0_25], %35 {strides = array<i32>} : memref<8x128xf32, #tpu.memory_space<vmem>>, vector<8x128xf32>,
    return
  }
  func.func @transform_0(%arg0: i32) -> (i32, i32) {
    %c0_i32 = arith.constant 0 : i32
    %c0_i32_0 = arith.constant 0 : i32
    return %arg0, %c0_i32 : i32, i32
  }
  func.func @transform_1(%arg0: i32) -> (i32, i32, i32) {
    %c0_i32 = arith.constant 0 : i32
    %c0_i32_0 = arith.constant 0 : i32
    %c0_i32_1 = arith.constant 0 : i32
    %c0_i32_2 = arith.constant 0 : i32
    return %c0_i32, %c0_i32_0, %c0_i32_1 : i32, i32, i32
  }
  func.func @transform_2(%arg0: i32) -> (i32, i32) {
    %c0_i32 = arith.constant 0 : i32
    %c0_i32_0 = arith.constant 0 : i32
    %c0_i32_1 = arith.constant 0 : i32
    return %c0_i32, %c0_i32_0 : i32, i32
  }
  func.func @transform_3(%arg0: i32) -> (i32, i32) {
    %c0_i32 = arith.constant 0 : i32
    %c0_i32_0 = arith.constant 0 : i32
    %c0_i32_1 = arith.constant 0 : i32
    return %c0_i32, %c0_i32_0 : i32, i32
  }
  func.func @transform_4(%arg0: i32) -> (i32, i32) {
    %c0_i32 = arith.constant 0 : i32
    %c0_i32_0 = arith.constant 0 : i32
    %c0_i32_1 = arith.constant 0 : i32
    return %c0_i32, %c0_i32_0 : i32, i32
  }
  func.func @transform_5(%arg0: i32) -> (i32, i32) {
    %c0_i32 = arith.constant 0 : i32
    %c0_i32_0 = arith.constant 0 : i32
    return %arg0, %c0_i32 : i32, i32
  }
}

</mosaic_0001>

<llo_original>
// kernel: textcnn_forward.1
$region0: #{textcnn_forward.1}
  #allocation0 [shape = 'u32[]', space=smem, size = 0x4, offset = 0x4, fixed_abs, tag = 'smem constant byte address 0x4 - core index']
  #allocation1 [shape = 'u32[144,128]{1,0:T(1,128)}', space=vmem, size = 0x12000, scoped, tag = 'internal scratch']
  %s0 = inlined_call_operand.vmem [shape: bf16[128,32], index: 0, kind: input, shape index: {}]
  %s1 = inlined_call_operand.vmem [shape: bf16[5,32,128], index: 1, kind: input, shape index: {}]
  %s2 = inlined_call_operand.vmem [shape: f32[16,128], index: 2, kind: input, shape index: {}]
  %s3 = inlined_call_operand.vmem [shape: bf16[128,128], index: 3, kind: input, shape index: {}]
  %s4 = inlined_call_operand.vmem [shape: f32[1,128], index: 4, kind: input, shape index: {}]
  %s5 = inlined_call_operand.vmem [shape: f32[8,128], index: 5, kind: output, shape index: {}]
  %s6 = sld [smem:[#allocation0]]
  $region30: #{textcnn_forward.1} parent=0
    _
  %s8 = ssub.s32 1, %s6
  %s9 = scalar_select 0, %s8, %s6
  // Predicated region
  $region2: #{textcnn_forward.1} parent=0 // pred_check
    _
  $region3: #{textcnn_forward.1} parent=0 // pred_check_branch
    %11 = sbr.rel (0) target = $region5
  $region4: #{textcnn_forward.1} parent=0 // pred_region
    _
  $region5: #{textcnn_forward.1} parent=0 // pred_fallthru
    _
  // Predicated region
  $region6: #{textcnn_forward.1} parent=0 // pred_check
    _
  $region7: #{textcnn_forward.1} parent=0 // pred_check_branch
    %13 = sbr.rel (0) target = $region9
  $region8: #{textcnn_forward.1} parent=0 // pred_region
    _
  $region9: #{textcnn_forward.1} parent=0 // pred_fallthru
    _
  // Predicated region
  $region10: #{textcnn_forward.1} parent=0 // pred_check
    _
  $region11: #{textcnn_forward.1} parent=0 // pred_check_branch
    %15 = sbr.rel (0) target = $region13
  $region12: #{textcnn_forward.1} parent=0 // pred_region
    _
  $region13: #{textcnn_forward.1} parent=0 // pred_fallthru
    _
  // Predicated region
  $region14: #{textcnn_forward.1} parent=0 // pred_check
    _
  $region15: #{textcnn_forward.1} parent=0 // pred_check_branch
    %17 = sbr.rel (0) target = $region17
  $region16: #{textcnn_forward.1} parent=0 // pred_region
    _
  $region17: #{textcnn_forward.1} parent=0 // pred_fallthru
    _
  // Predicated region
  $region18: #{textcnn_forward.1} parent=0 // pred_check
    _
  $region19: #{textcnn_forward.1} parent=0 // pred_check_branch
    %19 = sbr.rel (0) target = $region21
  $region20: #{textcnn_forward.1} parent=0 // pred_region
    _
  $region21: #{textcnn_forward.1} parent=0 // pred_fallthru
    _
  %v21 = vld [vmem:[%s0] sm:$0xf]
  %v22 = vld [vmem:[%s0 + $0x4] sm:$0xf]
  %v23 = vld [vmem:[%s0 + $0x8] sm:$0xf]
  %v24 = vld [vmem:[%s0 + $0xc] sm:$0xf]
  %v25 = vld [vmem:[%s0 + $0x10] sm:$0xf]
  %v26 = vld [vmem:[%s0 + $0x14] sm:$0xf]
  %v27 = vld [vmem:[%s0 + $0x18] sm:$0xf]
  %v28 = vld [vmem:[%s0 + $0x1c] sm:$0xf]
  %v29 = vld [vmem:[%s0 + $0x20] sm:$0xf]
  %v30 = vld [vmem:[%s0 + $0x24] sm:$0xf]
  %v31 = vld [vmem:[%s0 + $0x28] sm:$0xf]
  %v32 = vld [vmem:[%s0 + $0x2c] sm:$0xf]
  %v33 = vld [vmem:[%s0 + $0x30] sm:$0xf]
  %v34 = vld [vmem:[%s0 + $0x34] sm:$0xf]
  %v35 = vld [vmem:[%s0 + $0x38] sm:$0xf]
  %v36 = vld [vmem:[%s0 + $0x3c] sm:$0xf]
  %v37 = vld [vmem:[%s1] sm:$0xf]
  %v38 = vld [vmem:[%s1 + $0x4] sm:$0xf]
  %v39 = vld [vmem:[%s1 + $0x8] sm:$0xf]
  %v40 = vld [vmem:[%s1 + $0xc] sm:$0xf]
  %s41 = scalar_lea.vmem %s1, 16
  %v42 = vld [vmem:[%s41] sm:$0xf]
  %v43 = vld [vmem:[%s41 + $0x4] sm:$0xf]
  %v44 = vld [vmem:[%s41 + $0x8] sm:$0xf]
  %v45 = vld [vmem:[%s41 + $0xc] sm:$0xf]
  %v62 = vunpack.c.l.b16 %v21
  %v63 = vunpack.c.l.b16 %v22
  %v64 = vunpack.c.l.b16 %v23
  %v65 = vunpack.c.l.b16 %v24
  %v66 = vunpack.c.l.b16 %v25
  %v67 = vunpack.c.l.b16 %v26
  %v68 = vunpack.c.l.b16 %v27
  %v69 = vunpack.c.l.b16 %v28
  %v70 = vunpack.c.l.b16 %v29
  %v71 = vunpack.c.l.b16 %v30
  %v72 = vunpack.c.l.b16 %v31
  %v73 = vunpack.c.l.b16 %v32
  %v74 = vunpack.c.l.b16 %v33
  %v75 = vunpack.c.l.b16 %v34
  %v76 = vunpack.c.l.b16 %v35
  %v77 = vunpack.c.l.b16 %v36
  %v78 = vpack.c.b16 %v63, %v62
  %v79 = vpack.c.b16 %v65, %v64
  %v80 = vpack.c.b16 %v67, %v66
  %v81 = vpack.c.b16 %v69, %v68
  %v82 = vpack.c.b16 %v71, %v70
  %v83 = vpack.c.b16 %v73, %v72
  %v84 = vpack.c.b16 %v75, %v74
  %v85 = vpack.c.b16 %v77, %v76
  %v90 = vunpack.c.l.b16 %v42
  %v91 = vunpack.c.l.b16 %v43
  %v92 = vunpack.c.l.b16 %v44
  %v93 = vunpack.c.l.b16 %v45
  %v94 = vpack.c.b16 %v91, %v90
  %v95 = vpack.c.b16 %v93, %v92
  %vm98 = vcmask 261120
  %v100 = vsel %vm98, %v78, 0
  %v103 = vsel %vm98, %v79, 0
  %v106 = vsel %vm98, %v80, 0
  %v109 = vsel %vm98, %v81, 0
  %v112 = vsel %vm98, %v82, 0
  %v115 = vsel %vm98, %v83, 0
  %v118 = vsel %vm98, %v84, 0
  %v121 = vsel %vm98, %v85, 0
  %123 = vmatprep.subr.bf16.mxu0 0
  %124 = vmatpush1.bf16.msra.mxu0 0
  %125 = vmatprep.subr.bf16.mxu0 0
  %126 = vmatpush1.bf16.msra.mxu0 0
  %127 = vmatprep.subr.bf16.mxu0 0
  %128 = vmatpush1.bf16.msra.mxu0 0
  %129 = vmatprep.subr.bf16.mxu0 0
  %130 = vmatpush1.bf16.msra.mxu0 0
  %131 = vmatprep.subr.bf16.mxu0 0
  %132 = vmatpush1.bf16.msra.mxu0 0
  %133 = vmatprep.subr.bf16.mxu0 0
  %134 = vmatpush1.bf16.msra.mxu0 0
  %135 = vmatprep.subr.bf16.mxu0 0
  %136 = vmatpush1.bf16.msra.mxu0 %v95
  %137 = vmatprep.subr.bf16.mxu0 0
  %138 = vmatpush1.bf16.msra.mxu0 %v94
  %139 = vmatprep.subr.bf16.mxu0 0
  %140 = vmatpush2.bf16.msra.mxu0 0
  %141 = vmatprep.subr.bf16.mxu0 0
  %142 = vmatpush2.bf16.msra.mxu0 0
  %143 = vmatprep.subr.bf16.mxu0 0
  %144 = vmatpush2.bf16.msra.mxu0 0
  %145 = vmatprep.subr.bf16.mxu0 0
  %146 = vmatpush2.bf16.msra.mxu0 0
  %147 = vmatprep.subr.bf16.mxu0 0
  %148 = vmatpush2.bf16.msra.mxu0 0
  %149 = vmatprep.subr.bf16.mxu0 0
  %150 = vmatpush2.bf16.msra.mxu0 0
  %151 = vmatprep.subr.bf16.mxu0 0
  %152 = vmatpush2.bf16.msra.mxu0 0
  %153 = vmatprep.subr.bf16.mxu0 0
  %154 = vmatpush2.bf16.msra.mxu0 0
  %155 = vmatprep.mubr.bf16.mxu0 0
  %156 = vmatmul.mubr.bf16.gmra.mxu0 %v100
  %v157 = vpop.f32.mrf.mxu0
  %v158 = vadd.f32 0.0, %v157
  %v159 = vpop.f32.mrf.mxu0
  %v160 = vpop.f32.mrf.mxu0
  %v161 = vadd.f32 0.0, %v160
  %v162 = vpop.f32.mrf.mxu0
  %163 = vmatprep.mubr.bf16.mxu0 0
  %164 = vmatmul.mubr.bf16.gmra.mxu0 %v103
  %v165 = vpop.f32.mrf.mxu0
  %v166 = vadd.f32 0.0, %v165
  %v167 = vpop.f32.mrf.mxu0
  %v168 = vpop.f32.mrf.mxu0
  %v169 = vadd.f32 0.0, %v168
  %v170 = vpop.f32.mrf.mxu0
  %171 = vmatprep.mubr.bf16.mxu0 0
  %172 = vmatmul.mubr.bf16.gmra.mxu0 %v106
  %v173 = vpop.f32.mrf.mxu0
  %v174 = vadd.f32 0.0, %v173
  %v175 = vpop.f32.mrf.mxu0
  %v176 = vpop.f32.mrf.mxu0
  %v177 = vadd.f32 0.0, %v176
  %v178 = vpop.f32.mrf.mxu0
  %179 = vmatprep.mubr.bf16.mxu0 0
  %180 = vmatmul.mubr.bf16.gmra.mxu0 %v109
  %v181 = vpop.f32.mrf.mxu0
  %v182 = vadd.f32 0.0, %v181
  %v183 = vpop.f32.mrf.mxu0
  %v184 = vpop.f32.mrf.mxu0
  %v185 = vadd.f32 0.0, %v184
  %v186 = vpop.f32.mrf.mxu0
  %187 = vmatprep.mubr.bf16.mxu0 0
  %188 = vmatmul.mubr.bf16.gmra.mxu0 %v112
  %v189 = vpop.f32.mrf.mxu0
  %v190 = vadd.f32 0.0, %v189
  %v191 = vpop.f32.mrf.mxu0
  %v192 = vpop.f32.mrf.mxu0
  %v193 = vadd.f32 0.0, %v192
  %v194 = vpop.f32.mrf.mxu0
  %195 = vmatprep.mubr.bf16.mxu0 0
  %196 = vmatmul.mubr.bf16.gmra.mxu0 %v115
  %v197 = vpop.f32.mrf.mxu0
  %v198 = vadd.f32 0.0, %v197
  %v199 = vpop.f32.mrf.mxu0
  %v200 = vpop.f32.mrf.mxu0
  %v201 = vadd.f32 0.0, %v200
  %v202 = vpop.f32.mrf.mxu0
  %203 = vmatprep.mubr.bf16.mxu0 0
  %204 = vmatmul.mubr.bf16.gmra.mxu0 %v118
  %v205 = vpop.f32.mrf.mxu0
  %v206 = vadd.f32 0.0, %v205
  %v207 = vpop.f32.mrf.mxu0
  %v208 = vpop.f32.mrf.mxu0
  %v209 = vadd.f32 0.0, %v208
  %v210 = vpop.f32.mrf.mxu0
  %211 = vmatprep.mubr.bf16.mxu0 0
  %212 = vmatmul.mubr.bf16.gmra.mxu0 %v121
  %v213 = vpop.f32.mrf.mxu0
  %v214 = vadd.f32 0.0, %v213
  %v215 = vpop.f32.mrf.mxu0
  %v216 = vpop.f32.mrf.mxu0
  %v217 = vadd.f32 0.0, %v216
  %v218 = vpop.f32.mrf.mxu0
  %219 = vdwg.mxu0
  %v220 = vrot.slane %v158, 1
  %v221 = vrot.slane %v161, 1
  %v222 = vrot.slane %v166, 1
  %v223 = vrot.slane %v169, 1
  %v224 = vrot.slane %v174, 1
  %v225 = vrot.slane %v177, 1
  %v226 = vrot.slane %v182, 1
  %v227 = vrot.slane %v185, 1
  %v228 = vrot.slane %v190, 1
  %v229 = vrot.slane %v193, 1
  %v230 = vrot.slane %v198, 1
  %v231 = vrot.slane %v201, 1
  %v232 = vrot.slane %v206, 1
  %v233 = vrot.slane %v209, 1
  %v234 = vrot.slane %v214, 1
  %v235 = vrot.slane %v217, 1
  %v236 = vlaneseq
  %v237 = vshrl.u32 %v236, 7
  %vm238 = vcmp.lt.s32.totalorder %v237, 7
  %v239 = vsel %vm238, %v234, %v235
  %v240 = vsel %vm238, %v233, %v234
  %v241 = vsel %vm238, %v232, %v233
  %v242 = vsel %vm238, %v231, %v232
  %v243 = vsel %vm238, %v230, %v231
  %v244 = vsel %vm238, %v229, %v230
  %v245 = vsel %vm238, %v228, %v229
  %v246 = vsel %vm238, %v227, %v228
  %v247 = vsel %vm238, %v226, %v227
  %v248 = vsel %vm238, %v225, %v226
  %v249 = vsel %vm238, %v224, %v225
  %v250 = vsel %vm238, %v223, %v224
  %v251 = vsel %vm238, %v222, %v223
  %v252 = vsel %vm238, %v221, %v222
  %v253 = vsel %vm238, %v220, %v221
  %v254 = vsel %vm238, %v235, %v220
  %v259 = vunpack.c.l.b16 %v37
  %v260 = vunpack.c.l.b16 %v38
  %v261 = vunpack.c.l.b16 %v39
  %v262 = vunpack.c.l.b16 %v40
  %v263 = vpack.c.b16 %v260, %v259
  %v264 = vpack.c.b16 %v262, %v261
  %267 = vmatprep.subr.bf16.mxu0 0
  %268 = vmatpush1.bf16.msra.mxu0 0
  %269 = vmatprep.subr.bf16.mxu0 0
  %270 = vmatpush1.bf16.msra.mxu0 0
  %271 = vmatprep.subr.bf16.mxu0 0
  %272 = vmatpush1.bf16.msra.mxu0 0
  %273 = vmatprep.subr.bf16.mxu0 0
  %274 = vmatpush1.bf16.msra.mxu0 0
  %275 = vmatprep.subr.bf16.mxu0 0
  %276 = vmatpush1.bf16.msra.mxu0 0
  %277 = vmatprep.subr.bf16.mxu0 0
  %278 = vmatpush1.bf16.msra.mxu0 0
  %279 = vmatprep.subr.bf16.mxu0 0
  %280 = vmatpush1.bf16.msra.mxu0 %v264
  %281 = vmatprep.subr.bf16.mxu0 0
  %282 = vmatpush1.bf16.msra.mxu0 %v263
  %283 = vmatprep.subr.bf16.mxu0 0
  %284 = vmatpush2.bf16.msra.mxu0 0
  %285 = vmatprep.subr.bf16.mxu0 0
  %286 = vmatpush2.bf16.msra.mxu0 0
  %287 = vmatprep.subr.bf16.mxu0 0
  %288 = vmatpush2.bf16.msra.mxu0 0
  %289 = vmatprep.subr.bf16.mxu0 0
  %290 = vmatpush2.bf16.msra.mxu0 0
  %291 = vmatprep.subr.bf16.mxu0 0
  %292 = vmatpush2.bf16.msra.mxu0 0
  %293 = vmatprep.subr.bf16.mxu0 0
  %294 = vmatpush2.bf16.msra.mxu0 0
  %295 = vmatprep.subr.bf16.mxu0 0
  %296 = vmatpush2.bf16.msra.mxu0 0
  %297 = vmatprep.subr.bf16.mxu0 0
  %298 = vmatpush2.bf16.msra.mxu0 0
  %299 = vmatprep.mubr.bf16.mxu0 0
  %300 = vmatmul.mubr.bf16.gmra.mxu0 %v100
  %v301 = vpop.f32.mrf.mxu0
  %v302 = vadd.f32 %v253, %v301
  %v303 = vpop.f32.mrf.mxu0
  %v304 = vpop.f32.mrf.mxu0
  %v305 = vadd.f32 %v252, %v304
  %v306 = vpop.f32.mrf.mxu0
  %307 = vmatprep.mubr.bf16.mxu0 0
  %308 = vmatmul.mubr.bf16.gmra.mxu0 %v103
  %v309 = vpop.f32.mrf.mxu0
  %v310 = vadd.f32 %v251, %v309
  %v311 = vpop.f32.mrf.mxu0
  %v312 = vpop.f32.mrf.mxu0
  %v313 = vadd.f32 %v250, %v312
  %v314 = vpop.f32.mrf.mxu0
  %315 = vmatprep.mubr.bf16.mxu0 0
  %316 = vmatmul.mubr.bf16.gmra.mxu0 %v106
  %v317 = vpop.f32.mrf.mxu0
  %v318 = vadd.f32 %v249, %v317
  %v319 = vpop.f32.mrf.mxu0
  %v320 = vpop.f32.mrf.mxu0
  %v321 = vadd.f32 %v248, %v320
  %v322 = vpop.f32.mrf.mxu0
  %323 = vmatprep.mubr.bf16.mxu0 0
  %324 = vmatmul.mubr.bf16.gmra.mxu0 %v109
  %v325 = vpop.f32.mrf.mxu0
  %v326 = vadd.f32 %v247, %v325
  %v327 = vpop.f32.mrf.mxu0
  %v328 = vpop.f32.mrf.mxu0
  %v329 = vadd.f32 %v246, %v328
  %v330 = vpop.f32.mrf.mxu0
  %331 = vmatprep.mubr.bf16.mxu0 0
  %332 = vmatmul.mubr.bf16.gmra.mxu0 %v112
  %v333 = vpop.f32.mrf.mxu0
  %v334 = vadd.f32 %v245, %v333
  %v335 = vpop.f32.mrf.mxu0
  %v336 = vpop.f32.mrf.mxu0
  %v337 = vadd.f32 %v244, %v336
  %v338 = vpop.f32.mrf.mxu0
  %339 = vmatprep.mubr.bf16.mxu0 0
  %340 = vmatmul.mubr.bf16.gmra.mxu0 %v115
  %v341 = vpop.f32.mrf.mxu0
  %v342 = vadd.f32 %v243, %v341
  %v343 = vpop.f32.mrf.mxu0
  %v344 = vpop.f32.mrf.mxu0
  %v345 = vadd.f32 %v242, %v344
  %v346 = vpop.f32.mrf.mxu0
  %347 = vmatprep.mubr.bf16.mxu0 0
  %348 = vmatmul.mubr.bf16.gmra.mxu0 %v118
  %v349 = vpop.f32.mrf.mxu0
  %v350 = vadd.f32 %v241, %v349
  %v351 = vpop.f32.mrf.mxu0
  %v352 = vpop.f32.mrf.mxu0
  %v353 = vadd.f32 %v240, %v352
  %v354 = vpop.f32.mrf.mxu0
  %355 = vmatprep.mubr.bf16.mxu0 0
  %356 = vmatmul.mubr.bf16.gmra.mxu0 %v121
  %v357 = vpop.f32.mrf.mxu0
  %v358 = vadd.f32 %v239, %v357
  %v359 = vpop.f32.mrf.mxu0
  %v360 = vpop.f32.mrf.mxu0
  %v361 = vadd.f32 %v254, %v360
  %v362 = vpop.f32.mrf.mxu0
  %363 = vdwg.mxu0
  %s364 = scalar_lea.vmem %s1, 32
  %v365 = vld [vmem:[%s364] sm:$0xf]
  %v366 = vld [vmem:[%s364 + $0x4] sm:$0xf]
  %v367 = vld [vmem:[%s364 + $0x8] sm:$0xf]
  %v368 = vld [vmem:[%s364 + $0xc] sm:$0xf]
  %v373 = vunpack.c.l.b16 %v365
  %v374 = vunpack.c.l.b16 %v366
  %v375 = vunpack.c.l.b16 %v367
  %v376 = vunpack.c.l.b16 %v368
  %v377 = vpack.c.b16 %v374, %v373
  %v378 = vpack.c.b16 %v376, %v375
  %381 = vmatprep.subr.bf16.mxu0 0
  %382 = vmatpush1.bf16.msra.mxu0 0
  %383 = vmatprep.subr.bf16.mxu0 0
  %384 = vmatpush1.bf16.msra.mxu0 0
  %385 = vmatprep.subr.bf16.mxu0 0
  %386 = vmatpush1.bf16.msra.mxu0 0
  %387 = vmatprep.subr.bf16.mxu0 0
  %388 = vmatpush1.bf16.msra.mxu0 0
  %389 = vmatprep.subr.bf16.mxu0 0
  %390 = vmatpush1.bf16.msra.mxu0 0
  %391 = vmatprep.subr.bf16.mxu0 0
  %392 = vmatpush1.bf16.msra.mxu0 0
  %393 = vmatprep.subr.bf16.mxu0 0
  %394 = vmatpush1.bf16.msra.mxu0 %v378
  %395 = vmatprep.subr.bf16.mxu0 0
  %396 = vmatpush1.bf16.msra.mxu0 %v377
  %397 = vmatprep.subr.bf16.mxu0 0
  %398 = vmatpush2.bf16.msra.mxu0 0
  %399 = vmatprep.subr.bf16.mxu0 0
  %400 = vmatpush2.bf16.msra.mxu0 0
  %401 = vmatprep.subr.bf16.mxu0 0
  %402 = vmatpush2.bf16.msra.mxu0 0
  %403 = vmatprep.subr.bf16.mxu0 0
  %404 = vmatpush2.bf16.msra.mxu0 0
  %405 = vmatprep.subr.bf16.mxu0 0
  %406 = vmatpush2.bf16.msra.mxu0 0
  %407 = vmatprep.subr.bf16.mxu0 0
  %408 = vmatpush2.bf16.msra.mxu0 0
  %409 = vmatprep.subr.bf16.mxu0 0
  %410 = vmatpush2.bf16.msra.mxu0 0
  %411 = vmatprep.subr.bf16.mxu0 0
  %412 = vmatpush2.bf16.msra.mxu0 0
  %413 = vmatprep.mubr.bf16.mxu0 0
  %414 = vmatmul.mubr.bf16.gmra.mxu0 %v100
  %v415 = vpop.f32.mrf.mxu0
  %v416 = vadd.f32 0.0, %v415
  %v417 = vpop.f32.mrf.mxu0
  %v418 = vpop.f32.mrf.mxu0
  %v419 = vadd.f32 0.0, %v418
  %v420 = vpop.f32.mrf.mxu0
  %421 = vmatprep.mubr.bf16.mxu0 0
  %422 = vmatmul.mubr.bf16.gmra.mxu0 %v103
  %v423 = vpop.f32.mrf.mxu0
  %v424 = vadd.f32 0.0, %v423
  %v425 = vpop.f32.mrf.mxu0
  %v426 = vpop.f32.mrf.mxu0
  %v427 = vadd.f32 0.0, %v426
  %v428 = vpop.f32.mrf.mxu0
  %429 = vmatprep.mubr.bf16.mxu0 0
  %430 = vmatmul.mubr.bf16.gmra.mxu0 %v106
  %v431 = vpop.f32.mrf.mxu0
  %v432 = vadd.f32 0.0, %v431
  %v433 = vpop.f32.mrf.mxu0
  %v434 = vpop.f32.mrf.mxu0
  %v435 = vadd.f32 0.0, %v434
  %v436 = vpop.f32.mrf.mxu0
  %437 = vmatprep.mubr.bf16.mxu0 0
  %438 = vmatmul.mubr.bf16.gmra.mxu0 %v109
  %v439 = vpop.f32.mrf.mxu0
  %v440 = vadd.f32 0.0, %v439
  %v441 = vpop.f32.mrf.mxu0
  %v442 = vpop.f32.mrf.mxu0
  %v443 = vadd.f32 0.0, %v442
  %v444 = vpop.f32.mrf.mxu0
  %445 = vmatprep.mubr.bf16.mxu0 0
  %446 = vmatmul.mubr.bf16.gmra.mxu0 %v112
  %v447 = vpop.f32.mrf.mxu0
  %v448 = vadd.f32 0.0, %v447
  %v449 = vpop.f32.mrf.mxu0
  %v450 = vpop.f32.mrf.mxu0
  %v451 = vadd.f32 0.0, %v450
  %v452 = vpop.f32.mrf.mxu0
  %453 = vmatprep.mubr.bf16.mxu0 0
  %454 = vmatmul.mubr.bf16.gmra.mxu0 %v115
  %v455 = vpop.f32.mrf.mxu0
  %v456 = vadd.f32 0.0, %v455
  %v457 = vpop.f32.mrf.mxu0
  %v458 = vpop.f32.mrf.mxu0
  %v459 = vadd.f32 0.0, %v458
  %v460 = vpop.f32.mrf.mxu0
  %461 = vmatprep.mubr.bf16.mxu0 0
  %462 = vmatmul.mubr.bf16.gmra.mxu0 %v118
  %v463 = vpop.f32.mrf.mxu0
  %v464 = vadd.f32 0.0, %v463
  %v465 = vpop.f32.mrf.mxu0
  %v466 = vpop.f32.mrf.mxu0
  %v467 = vadd.f32 0.0, %v466
  %v468 = vpop.f32.mrf.mxu0
  %469 = vmatprep.mubr.bf16.mxu0 0
  %470 = vmatmul.mubr.bf16.gmra.mxu0 %v121
  %v471 = vpop.f32.mrf.mxu0
  %v472 = vadd.f32 0.0, %v471
  %v473 = vpop.f32.mrf.mxu0
  %v474 = vpop.f32.mrf.mxu0
  %v475 = vadd.f32 0.0, %v474
  %v476 = vpop.f32.mrf.mxu0
  %477 = vdwg.mxu0
  %v478 = vrot.slane %v416, 2
  %v479 = vrot.slane %v419, 2
  %v480 = vrot.slane %v424, 2
  %v481 = vrot.slane %v427, 2
  %v482 = vrot.slane %v432, 2
  %v483 = vrot.slane %v435, 2
  %v484 = vrot.slane %v440, 2
  %v485 = vrot.slane %v443, 2
  %v486 = vrot.slane %v448, 2
  %v487 = vrot.slane %v451, 2
  %v488 = vrot.slane %v456, 2
  %v489 = vrot.slane %v459, 2
  %v490 = vrot.slane %v464, 2
  %v491 = vrot.slane %v467, 2
  %v492 = vrot.slane %v472, 2
  %v493 = vrot.slane %v475, 2
  %vm494 = vcmp.lt.s32.totalorder %v237, 6
  %v495 = vsel %vm494, %v492, %v493
  %v496 = vsel %vm494, %v491, %v492
  %v497 = vsel %vm494, %v490, %v491
  %v498 = vsel %vm494, %v489, %v490
  %v499 = vsel %vm494, %v488, %v489
  %v500 = vsel %vm494, %v487, %v488
  %v501 = vsel %vm494, %v486, %v487
  %v502 = vsel %vm494, %v485, %v486
  %v503 = vsel %vm494, %v484, %v485
  %v504 = vsel %vm494, %v483, %v484
  %v505 = vsel %vm494, %v482, %v483
  %v506 = vsel %vm494, %v481, %v482
  %v507 = vsel %vm494, %v480, %v481
  %v508 = vsel %vm494, %v479, %v480
  %v509 = vsel %vm494, %v478, %v479
  %v510 = vsel %vm494, %v493, %v478
  %v511 = vadd.f32 %v302, %v509
  %v512 = vadd.f32 %v305, %v508
  %v513 = vadd.f32 %v310, %v507
  %v514 = vadd.f32 %v313, %v506
  %v515 = vadd.f32 %v318, %v505
  %v516 = vadd.f32 %v321, %v504
  %v517 = vadd.f32 %v326, %v503
  %v518 = vadd.f32 %v329, %v502
  %v519 = vadd.f32 %v334, %v501
  %v520 = vadd.f32 %v337, %v500
  %v521 = vadd.f32 %v342, %v499
  %v522 = vadd.f32 %v345, %v498
  %v523 = vadd.f32 %v350, %v497
  %v524 = vadd.f32 %v353, %v496
  %v525 = vadd.f32 %v358, %v495
  %v526 = vadd.f32 %v361, %v510
  %s527 = scalar_lea.vmem %s1, 48
  %v528 = vld [vmem:[%s527] sm:$0xf]
  %v529 = vld [vmem:[%s527 + $0x4] sm:$0xf]
  %v530 = vld [vmem:[%s527 + $0x8] sm:$0xf]
  %v531 = vld [vmem:[%s527 + $0xc] sm:$0xf]
  %v536 = vunpack.c.l.b16 %v528
  %v537 = vunpack.c.l.b16 %v529
  %v538 = vunpack.c.l.b16 %v530
  %v539 = vunpack.c.l.b16 %v531
  %v540 = vpack.c.b16 %v537, %v536
  %v541 = vpack.c.b16 %v539, %v538
  %544 = vmatprep.subr.bf16.mxu0 0
  %545 = vmatpush1.bf16.msra.mxu0 0
  %546 = vmatprep.subr.bf16.mxu0 0
  %547 = vmatpush1.bf16.msra.mxu0 0
  %548 = vmatprep.subr.bf16.mxu0 0
  %549 = vmatpush1.bf16.msra.mxu0 0
  %550 = vmatprep.subr.bf16.mxu0 0
  %551 = vmatpush1.bf16.msra.mxu0 0
  %552 = vmatprep.subr.bf16.mxu0 0
  %553 = vmatpush1.bf16.msra.mxu0 0
  %554 = vmatprep.subr.bf16.mxu0 0
  %555 = vmatpush1.bf16.msra.mxu0 0
  %556 = vmatprep.subr.bf16.mxu0 0
  %557 = vmatpush1.bf16.msra.mxu0 %v541
  %558 = vmatprep.subr.bf16.mxu0 0
  %559 = vmatpush1.bf16.msra.mxu0 %v540
  %560 = vmatprep.subr.bf16.mxu0 0
  %561 = vmatpush2.bf16.msra.mxu0 0
  %562 = vmatprep.subr.bf16.mxu0 0
  %563 = vmatpush2.bf16.msra.mxu0 0
  %564 = vmatprep.subr.bf16.mxu0 0
  %565 = vmatpush2.bf16.msra.mxu0 0
  %566 = vmatprep.subr.bf16.mxu0 0
  %567 = vmatpush2.bf16.msra.mxu0 0
  %568 = vmatprep.subr.bf16.mxu0 0
  %569 = vmatpush2.bf16.msra.mxu0 0
  %570 = vmatprep.subr.bf16.mxu0 0
  %571 = vmatpush2.bf16.msra.mxu0 0
  %572 = vmatprep.subr.bf16.mxu0 0
  %573 = vmatpush2.bf16.msra.mxu0 0
  %574 = vmatprep.subr.bf16.mxu0 0
  %575 = vmatpush2.bf16.msra.mxu0 0
  %576 = vmatprep.mubr.bf16.mxu0 0
  %577 = vmatmul.mubr.bf16.gmra.mxu0 %v100
  %v578 = vpop.f32.mrf.mxu0
  %v579 = vadd.f32 0.0, %v578
  %v580 = vpop.f32.mrf.mxu0
  %v581 = vpop.f32.mrf.mxu0
  %v582 = vadd.f32 0.0, %v581
  %v583 = vpop.f32.mrf.mxu0
  %584 = vmatprep.mubr.bf16.mxu0 0
  %585 = vmatmul.mubr.bf16.gmra.mxu0 %v103
  %v586 = vpop.f32.mrf.mxu0
  %v587 = vadd.f32 0.0, %v586
  %v588 = vpop.f32.mrf.mxu0
  %v589 = vpop.f32.mrf.mxu0
  %v590 = vadd.f32 0.0, %v589
  %v591 = vpop.f32.mrf.mxu0
  %592 = vmatprep.mubr.bf16.mxu0 0
  %593 = vmatmul.mubr.bf16.gmra.mxu0 %v106
  %v594 = vpop.f32.mrf.mxu0
  %v595 = vadd.f32 0.0, %v594
  %v596 = vpop.f32.mrf.mxu0
  %v597 = vpop.f32.mrf.mxu0
  %v598 = vadd.f32 0.0, %v597
  %v599 = vpop.f32.mrf.mxu0
  %600 = vmatprep.mubr.bf16.mxu0 0
  %601 = vmatmul.mubr.bf16.gmra.mxu0 %v109
  %v602 = vpop.f32.mrf.mxu0
  %v603 = vadd.f32 0.0, %v602
  %v604 = vpop.f32.mrf.mxu0
  %v605 = vpop.f32.mrf.mxu0
  %v606 = vadd.f32 0.0, %v605
  %v607 = vpop.f32.mrf.mxu0
  %608 = vmatprep.mubr.bf16.mxu0 0
  %609 = vmatmul.mubr.bf16.gmra.mxu0 %v112
  %v610 = vpop.f32.mrf.mxu0
  %v611 = vadd.f32 0.0, %v610
  %v612 = vpop.f32.mrf.mxu0
  %v613 = vpop.f32.mrf.mxu0
  %v614 = vadd.f32 0.0, %v613
  %v615 = vpop.f32.mrf.mxu0
  %616 = vmatprep.mubr.bf16.mxu0 0
  %617 = vmatmul.mubr.bf16.gmra.mxu0 %v115
  %v618 = vpop.f32.mrf.mxu0
  %v619 = vadd.f32 0.0, %v618
  %v620 = vpop.f32.mrf.mxu0
  %v621 = vpop.f32.mrf.mxu0
  %v622 = vadd.f32 0.0, %v621
  %v623 = vpop.f32.mrf.mxu0
  %624 = vmatprep.mubr.bf16.mxu0 0
  %625 = vmatmul.mubr.bf16.gmra.mxu0 %v118
  %v626 = vpop.f32.mrf.mxu0
  %v627 = vadd.f32 0.0, %v626
  %v628 = vpop.f32.mrf.mxu0
  %v629 = vpop.f32.mrf.mxu0
  %v630 = vadd.f32 0.0, %v629
  %v631 = vpop.f32.mrf.mxu0
  %632 = vmatprep.mubr.bf16.mxu0 0
  %633 = vmatmul.mubr.bf16.gmra.mxu0 %v121
  %v634 = vpop.f32.mrf.mxu0
  %v635 = vadd.f32 0.0, %v634
  %v636 = vpop.f32.mrf.mxu0
  %v637 = vpop.f32.mrf.mxu0
  %v638 = vadd.f32 0.0, %v637
  %v639 = vpop.f32.mrf.mxu0
  %640 = vdwg.mxu0
  %v641 = vrot.slane %v579, 3
  %v642 = vrot.slane %v582, 3
  %v643 = vrot.slane %v587, 3
  %v644 = vrot.slane %v590, 3
  %v645 = vrot.slane %v595, 3
  %v646 = vrot.slane %v598, 3
  %v647 = vrot.slane %v603, 3
  %v648 = vrot.slane %v606, 3
  %v649 = vrot.slane %v611, 3
  %v650 = vrot.slane %v614, 3
  %v651 = vrot.slane %v619, 3
  %v652 = vrot.slane %v622, 3
  %v653 = vrot.slane %v627, 3
  %v654 = vrot.slane %v630, 3
  %v655 = vrot.slane %v635, 3
  %v656 = vrot.slane %v638, 3
  %vm657 = vcmp.lt.s32.totalorder %v237, 5
  %v658 = vsel %vm657, %v655, %v656
  %v659 = vsel %vm657, %v654, %v655
  %v660 = vsel %vm657, %v653, %v654
  %v661 = vsel %vm657, %v652, %v653
  %v662 = vsel %vm657, %v651, %v652
  %v663 = vsel %vm657, %v650, %v651
  %v664 = vsel %vm657, %v649, %v650
  %v665 = vsel %vm657, %v648, %v649
  %v666 = vsel %vm657, %v647, %v648
  %v667 = vsel %vm657, %v646, %v647
  %v668 = vsel %vm657, %v645, %v646
  %v669 = vsel %vm657, %v644, %v645
  %v670 = vsel %vm657, %v643, %v644
  %v671 = vsel %vm657, %v642, %v643
  %v672 = vsel %vm657, %v641, %v642
  %v673 = vsel %vm657, %v656, %v641
  %v674 = vadd.f32 %v511, %v672
  %v675 = vadd.f32 %v512, %v671
  %v676 = vadd.f32 %v513, %v670
  %v677 = vadd.f32 %v514, %v669
  %v678 = vadd.f32 %v515, %v668
  %v679 = vadd.f32 %v516, %v667
  %v680 = vadd.f32 %v517, %v666
  %v681 = vadd.f32 %v518, %v665
  %v682 = vadd.f32 %v519, %v664
  %v683 = vadd.f32 %v520, %v663
  %v684 = vadd.f32 %v521, %v662
  %v685 = vadd.f32 %v522, %v661
  %v686 = vadd.f32 %v523, %v660
  %v687 = vadd.f32 %v524, %v659
  %v688 = vadd.f32 %v525, %v658
  %v689 = vadd.f32 %v526, %v673
  %s690 = scalar_lea.vmem %s1, 64
  %v691 = vld [vmem:[%s690] sm:$0xf]
  %v692 = vld [vmem:[%s690 + $0x4] sm:$0xf]
  %v693 = vld [vmem:[%s690 + $0x8] sm:$0xf]
  %v694 = vld [vmem:[%s690 + $0xc] sm:$0xf]
  %v699 = vunpack.c.l.b16 %v691
  %v700 = vunpack.c.l.b16 %v692
  %v701 = vunpack.c.l.b16 %v693
  %v702 = vunpack.c.l.b16 %v694
  %v703 = vpack.c.b16 %v700, %v699
  %v704 = vpack.c.b16 %v702, %v701
  %707 = vmatprep.subr.bf16.mxu0 0
  %708 = vmatpush1.bf16.msra.mxu0 0
  %709 = vmatprep.subr.bf16.mxu0 0
  %710 = vmatpush1.bf16.msra.mxu0 0
  %711 = vmatprep.subr.bf16.mxu0 0
  %712 = vmatpush1.bf16.msra.mxu0 0
  %713 = vmatprep.subr.bf16.mxu0 0
  %714 = vmatpush1.bf16.msra.mxu0 0
  %715 = vmatprep.subr.bf16.mxu0 0
  %716 = vmatpush1.bf16.msra.mxu0 0
  %717 = vmatprep.subr.bf16.mxu0 0
  %718 = vmatpush1.bf16.msra.mxu0 0
  %719 = vmatprep.subr.bf16.mxu0 0
  %720 = vmatpush1.bf16.msra.mxu0 %v704
  %721 = vmatprep.subr.bf16.mxu0 0
  %722 = vmatpush1.bf16.msra.mxu0 %v703
  %723 = vmatprep.subr.bf16.mxu0 0
  %724 = vmatpush2.bf16.msra.mxu0 0
  %725 = vmatprep.subr.bf16.mxu0 0
  %726 = vmatpush2.bf16.msra.mxu0 0
  %727 = vmatprep.subr.bf16.mxu0 0
  %728 = vmatpush2.bf16.msra.mxu0 0
  %729 = vmatprep.subr.bf16.mxu0 0
  %730 = vmatpush2.bf16.msra.mxu0 0
  %731 = vmatprep.subr.bf16.mxu0 0
  %732 = vmatpush2.bf16.msra.mxu0 0
  %733 = vmatprep.subr.bf16.mxu0 0
  %734 = vmatpush2.bf16.msra.mxu0 0
  %735 = vmatprep.subr.bf16.mxu0 0
  %736 = vmatpush2.bf16.msra.mxu0 0
  %737 = vmatprep.subr.bf16.mxu0 0
  %738 = vmatpush2.bf16.msra.mxu0 0
  %739 = vmatprep.mubr.bf16.mxu0 0
  %740 = vmatmul.mubr.bf16.gmra.mxu0 %v100
  %v741 = vpop.f32.mrf.mxu0
  %v742 = vadd.f32 0.0, %v741
  %v743 = vpop.f32.mrf.mxu0
  %v744 = vpop.f32.mrf.mxu0
  %v745 = vadd.f32 0.0, %v744
  %v746 = vpop.f32.mrf.mxu0
  %747 = vmatprep.mubr.bf16.mxu0 0
  %748 = vmatmul.mubr.bf16.gmra.mxu0 %v103
  %v749 = vpop.f32.mrf.mxu0
  %v750 = vadd.f32 0.0, %v749
  %v751 = vpop.f32.mrf.mxu0
  %v752 = vpop.f32.mrf.mxu0
  %v753 = vadd.f32 0.0, %v752
  %v754 = vpop.f32.mrf.mxu0
  %755 = vmatprep.mubr.bf16.mxu0 0
  %756 = vmatmul.mubr.bf16.gmra.mxu0 %v106
  %v757 = vpop.f32.mrf.mxu0
  %v758 = vadd.f32 0.0, %v757
  %v759 = vpop.f32.mrf.mxu0
  %v760 = vpop.f32.mrf.mxu0
  %v761 = vadd.f32 0.0, %v760
  %v762 = vpop.f32.mrf.mxu0
  %763 = vmatprep.mubr.bf16.mxu0 0
  %764 = vmatmul.mubr.bf16.gmra.mxu0 %v109
  %v765 = vpop.f32.mrf.mxu0
  %v766 = vadd.f32 0.0, %v765
  %v767 = vpop.f32.mrf.mxu0
  %v768 = vpop.f32.mrf.mxu0
  %v769 = vadd.f32 0.0, %v768
  %v770 = vpop.f32.mrf.mxu0
  %771 = vmatprep.mubr.bf16.mxu0 0
  %772 = vmatmul.mubr.bf16.gmra.mxu0 %v112
  %v773 = vpop.f32.mrf.mxu0
  %v774 = vadd.f32 0.0, %v773
  %v775 = vpop.f32.mrf.mxu0
  %v776 = vpop.f32.mrf.mxu0
  %v777 = vadd.f32 0.0, %v776
  %v778 = vpop.f32.mrf.mxu0
  %779 = vmatprep.mubr.bf16.mxu0 0
  %780 = vmatmul.mubr.bf16.gmra.mxu0 %v115
  %v781 = vpop.f32.mrf.mxu0
  %v782 = vadd.f32 0.0, %v781
  %v783 = vpop.f32.mrf.mxu0
  %v784 = vpop.f32.mrf.mxu0
  %v785 = vadd.f32 0.0, %v784
  %v786 = vpop.f32.mrf.mxu0
  %787 = vmatprep.mubr.bf16.mxu0 0
  %788 = vmatmul.mubr.bf16.gmra.mxu0 %v118
  %v789 = vpop.f32.mrf.mxu0
  %v790 = vadd.f32 0.0, %v789
  %v791 = vpop.f32.mrf.mxu0
  %v792 = vpop.f32.mrf.mxu0
  %v793 = vadd.f32 0.0, %v792
  %v794 = vpop.f32.mrf.mxu0
  %795 = vmatprep.mubr.bf16.mxu0 0
  %796 = vmatmul.mubr.bf16.gmra.mxu0 %v121
  %v797 = vpop.f32.mrf.mxu0
  %v798 = vadd.f32 0.0, %v797
  %v799 = vpop.f32.mrf.mxu0
  %v800 = vpop.f32.mrf.mxu0
  %v801 = vadd.f32 0.0, %v800
  %v802 = vpop.f32.mrf.mxu0
  %803 = vdwg.mxu0
  %v804 = vrot.slane %v742, 4
  %v805 = vrot.slane %v745, 4
  %v806 = vrot.slane %v750, 4
  %v807 = vrot.slane %v753, 4
  %v808 = vrot.slane %v758, 4
  %v809 = vrot.slane %v761, 4
  %v810 = vrot.slane %v766, 4
  %v811 = vrot.slane %v769, 4
  %v812 = vrot.slane %v774, 4
  %v813 = vrot.slane %v777, 4
  %v814 = vrot.slane %v782, 4
  %v815 = vrot.slane %v785, 4
  %v816 = vrot.slane %v790, 4
  %v817 = vrot.slane %v793, 4
  %v818 = vrot.slane %v798, 4
  %v819 = vrot.slane %v801, 4
  %vm820 = vcmp.lt.s32.totalorder %v237, 4
  %v821 = vsel %vm820, %v818, %v819
  %v822 = vsel %vm820, %v817, %v818
  %v823 = vsel %vm820, %v816, %v817
  %v824 = vsel %vm820, %v815, %v816
  %v825 = vsel %vm820, %v814, %v815
  %v826 = vsel %vm820, %v813, %v814
  %v827 = vsel %vm820, %v812, %v813
  %v828 = vsel %vm820, %v811, %v812
  %v829 = vsel %vm820, %v810, %v811
  %v830 = vsel %vm820, %v809, %v810
  %v831 = vsel %vm820, %v808, %v809
  %v832 = vsel %vm820, %v807, %v808
  %v833 = vsel %vm820, %v806, %v807
  %v834 = vsel %vm820, %v805, %v806
  %v835 = vsel %vm820, %v804, %v805
  %v836 = vsel %vm820, %v819, %v804
  %v837 = vadd.f32 %v674, %v835
  %v838 = vadd.f32 %v675, %v834
  %v839 = vadd.f32 %v676, %v833
  %v840 = vadd.f32 %v677, %v832
  %v841 = vadd.f32 %v678, %v831
  %v842 = vadd.f32 %v679, %v830
  %v843 = vadd.f32 %v680, %v829
  %v844 = vadd.f32 %v681, %v828
  %v845 = vadd.f32 %v682, %v827
  %v846 = vadd.f32 %v683, %v826
  %v847 = vadd.f32 %v684, %v825
  %v848 = vadd.f32 %v685, %v824
  %v849 = vadd.f32 %v686, %v823
  %v850 = vadd.f32 %v687, %v822
  %v851 = vadd.f32 %v688, %v821
  %v852 = vadd.f32 %v689, %v836
  %v853 = vld [vmem:[%s2] sm:$0xff]
  %v854 = vld [vmem:[%s2 + $0x8] sm:$0xff]
  %v855 = vadd.f32 %v837, %v853
  %v856 = vadd.f32 %v838, %v854
  %v857 = vadd.f32 %v839, %v853
  %v858 = vadd.f32 %v840, %v854
  %v859 = vadd.f32 %v841, %v853
  %v860 = vadd.f32 %v842, %v854
  %v861 = vadd.f32 %v843, %v853
  %v862 = vadd.f32 %v844, %v854
  %v863 = vadd.f32 %v845, %v853
  %v864 = vadd.f32 %v846, %v854
  %v865 = vadd.f32 %v847, %v853
  %v866 = vadd.f32 %v848, %v854
  %v867 = vadd.f32 %v849, %v853
  %v868 = vadd.f32 %v850, %v854
  %v869 = vadd.f32 %v851, %v853
  %v870 = vadd.f32 %v852, %v854
  %v871 = vmax.f32 %v855, %v856
  %v872 = vrot.slane %v871, 4
  %v873 = vmax.f32 %v871, %v872
  %v874 = vrot.slane %v873, 2
  %v875 = vmax.f32 %v873, %v874
  %v876 = vrot.slane %v875, 1
  %v877 = vmax.f32 %v875, %v876
  %v878 = vmax.f32 %v857, %v858
  %v879 = vrot.slane %v878, 4
  %v880 = vmax.f32 %v878, %v879
  %v881 = vrot.slane %v880, 2
  %v882 = vmax.f32 %v880, %v881
  %v883 = vrot.slane %v882, 1
  %v884 = vmax.f32 %v882, %v883
  %v885 = vmax.f32 %v859, %v860
  %v886 = vrot.slane %v885, 4
  %v887 = vmax.f32 %v885, %v886
  %v888 = vrot.slane %v887, 2
  %v889 = vmax.f32 %v887, %v888
  %v890 = vrot.slane %v889, 1
  %v891 = vmax.f32 %v889, %v890
  %v892 = vmax.f32 %v861, %v862
  %v893 = vrot.slane %v892, 4
  %v894 = vmax.f32 %v892, %v893
  %v895 = vrot.slane %v894, 2
  %v896 = vmax.f32 %v894, %v895
  %v897 = vrot.slane %v896, 1
  %v898 = vmax.f32 %v896, %v897
  %v899 = vmax.f32 %v863, %v864
  %v900 = vrot.slane %v899, 4
  %v901 = vmax.f32 %v899, %v900
  %v902 = vrot.slane %v901, 2
  %v903 = vmax.f32 %v901, %v902
  %v904 = vrot.slane %v903, 1
  %v905 = vmax.f32 %v903, %v904
  %v906 = vmax.f32 %v865, %v866
  %v907 = vrot.slane %v906, 4
  %v908 = vmax.f32 %v906, %v907
  %v909 = vrot.slane %v908, 2
  %v910 = vmax.f32 %v908, %v909
  %v911 = vrot.slane %v910, 1
  %v912 = vmax.f32 %v910, %v911
  %v913 = vmax.f32 %v867, %v868
  %v914 = vrot.slane %v913, 4
  %v915 = vmax.f32 %v913, %v914
  %v916 = vrot.slane %v915, 2
  %v917 = vmax.f32 %v915, %v916
  %v918 = vrot.slane %v917, 1
  %v919 = vmax.f32 %v917, %v918
  %v920 = vmax.f32 %v869, %v870
  %v921 = vrot.slane %v920, 4
  %v922 = vmax.f32 %v920, %v921
  %v923 = vrot.slane %v922, 2
  %v924 = vmax.f32 %v922, %v923
  %v925 = vrot.slane %v924, 1
  %v926 = vmax.f32 %v924, %v925
  %v927 = vpack.c.bf16 %v877, %v877
  %v928 = vpack.c.bf16 %v884, %v884
  %v929 = vpack.c.bf16 %v891, %v891
  %v930 = vpack.c.bf16 %v898, %v898
  %v931 = vpack.c.bf16 %v905, %v905
  %v932 = vpack.c.bf16 %v912, %v912
  %v933 = vpack.c.bf16 %v919, %v919
  %v934 = vpack.c.bf16 %v926, %v926
  %v935 = vld [vmem:[%s3] sm:$0xf]
  %v936 = vld [vmem:[%s3 + $0x4] sm:$0xf]
  %v937 = vld [vmem:[%s3 + $0x8] sm:$0xf]
  %v938 = vld [vmem:[%s3 + $0xc] sm:$0xf]
  %v939 = vld [vmem:[%s3 + $0x10] sm:$0xf]
  %v940 = vld [vmem:[%s3 + $0x14] sm:$0xf]
  %v941 = vld [vmem:[%s3 + $0x18] sm:$0xf]
  %v942 = vld [vmem:[%s3 + $0x1c] sm:$0xf]
  %v943 = vld [vmem:[%s3 + $0x20] sm:$0xf]
  %v944 = vld [vmem:[%s3 + $0x24] sm:$0xf]
  %v945 = vld [vmem:[%s3 + $0x28] sm:$0xf]
  %v946 = vld [vmem:[%s3 + $0x2c] sm:$0xf]
  %v947 = vld [vmem:[%s3 + $0x30] sm:$0xf]
  %v948 = vld [vmem:[%s3 + $0x34] sm:$0xf]
  %v949 = vld [vmem:[%s3 + $0x38] sm:$0xf]
  %v950 = vld [vmem:[%s3 + $0x3c] sm:$0xf]
  %v951 = vld [vmem:[%s4] sm:$0x1]
  %v953 = vlaneseq
  %v954 = vshrl.u32 %v953, 7
  %v955 = vsub.s32 0, %v954
  %v956 = vrot.slane %v951, %v955
  %v966 = vunpack.c.l.b16 %v927
  %v967 = vunpack.c.l.b16 %v928
  %v968 = vunpack.c.l.b16 %v929
  %v969 = vunpack.c.l.b16 %v930
  %v970 = vunpack.c.l.b16 %v931
  %v971 = vunpack.c.l.b16 %v932
  %v972 = vunpack.c.l.b16 %v933
  %v973 = vunpack.c.l.b16 %v934
  %vm974 = vcmask 1041409
  %v975 = vsel %vm974, %v967, %v966
  %vm976 = vcmask 1042434
  %v977 = vsel %vm976, %v968, %v975
  %vm978 = vcmask 1043459
  %v979 = vsel %vm978, %v969, %v977
  %vm980 = vcmask 1044484
  %v981 = vsel %vm980, %v970, %v979
  %vm982 = vcmask 1045509
  %v983 = vsel %vm982, %v971, %v981
  %vm984 = vcmask 1046534
  %v985 = vsel %vm984, %v972, %v983
  %vm986 = vcmask 1047559
  %v987 = vsel %vm986, %v973, %v985
  %v988 = vpack.c.b16 %v987, %v987
  %v1006 = vunpack.c.l.b16 %v935
  %v1007 = vunpack.c.l.b16 %v936
  %v1008 = vunpack.c.l.b16 %v937
  %v1009 = vunpack.c.l.b16 %v938
  %v1010 = vunpack.c.l.b16 %v939
  %v1011 = vunpack.c.l.b16 %v940
  %v1012 = vunpack.c.l.b16 %v941
  %v1013 = vunpack.c.l.b16 %v942
  %v1014 = vunpack.c.l.b16 %v943
  %v1015 = vunpack.c.l.b16 %v944
  %v1016 = vunpack.c.l.b16 %v945
  %v1017 = vunpack.c.l.b16 %v946
  %v1018 = vunpack.c.l.b16 %v947
  %v1019 = vunpack.c.l.b16 %v948
  %v1020 = vunpack.c.l.b16 %v949
  %v1021 = vunpack.c.l.b16 %v950
  %v1022 = vpack.c.b16 %v1007, %v1006
  %v1023 = vpack.c.b16 %v1009, %v1008
  %v1024 = vpack.c.b16 %v1011, %v1010
  %v1025 = vpack.c.b16 %v1013, %v1012
  %v1026 = vpack.c.b16 %v1015, %v1014
  %v1027 = vpack.c.b16 %v1017, %v1016
  %v1028 = vpack.c.b16 %v1019, %v1018
  %v1029 = vpack.c.b16 %v1021, %v1020
  %1038 = vmatprep.subr.bf16.mxu0 0
  %1039 = vmatpush1.bf16.msra.mxu0 %v1029
  %1040 = vmatprep.subr.bf16.mxu0 0
  %1041 = vmatpush1.bf16.msra.mxu0 %v1028
  %1042 = vmatprep.subr.bf16.mxu0 0
  %1043 = vmatpush1.bf16.msra.mxu0 %v1027
  %1044 = vmatprep.subr.bf16.mxu0 0
  %1045 = vmatpush1.bf16.msra.mxu0 %v1026
  %1046 = vmatprep.subr.bf16.mxu0 0
  %1047 = vmatpush1.bf16.msra.mxu0 %v1025
  %1048 = vmatprep.subr.bf16.mxu0 0
  %1049 = vmatpush1.bf16.msra.mxu0 %v1024
  %1050 = vmatprep.subr.bf16.mxu0 0
  %1051 = vmatpush1.bf16.msra.mxu0 %v1023
  %1052 = vmatprep.subr.bf16.mxu0 0
  %1053 = vmatpush1.bf16.msra.mxu0 %v1022
  %1054 = vmatprep.subr.bf16.mxu0 0
  %1055 = vmatpush2.bf16.msra.mxu0 0
  %1056 = vmatprep.subr.bf16.mxu0 0
  %1057 = vmatpush2.bf16.msra.mxu0 0
  %1058 = vmatprep.subr.bf16.mxu0 0
  %1059 = vmatpush2.bf16.msra.mxu0 0
  %1060 = vmatprep.subr.bf16.mxu0 0
  %1061 = vmatpush2.bf16.msra.mxu0 0
  %1062 = vmatprep.subr.bf16.mxu0 0
  %1063 = vmatpush2.bf16.msra.mxu0 0
  %1064 = vmatprep.subr.bf16.mxu0 0
  %1065 = vmatpush2.bf16.msra.mxu0 0
  %1066 = vmatprep.subr.bf16.mxu0 0
  %1067 = vmatpush2.bf16.msra.mxu0 0
  %1068 = vmatprep.subr.bf16.mxu0 0
  %1069 = vmatpush2.bf16.msra.mxu0 0
  %1070 = vmatprep.mubr.bf16.mxu0 0
  %1071 = vmatmul.mubr.bf16.gmra.mxu0 %v988
  %v1072 = vpop.f32.mrf.mxu0
  %v1073 = vadd.f32 %v956, %v1072
  %v1074 = vpop.f32.mrf.mxu0
  %v1075 = vpop.f32.mrf.mxu0
  %v1076 = vpop.f32.mrf.mxu0
  %1077 = vdwg.mxu0
  %1078 = vst [vmem:[%s5] sm:$0xff] %v1073
  // Predicated region
  $region22: #{textcnn_forward.1} parent=0 // pred_check
    _
  $region23: #{textcnn_forward.1} parent=0 // pred_check_branch
    %1080 = sbr.rel (0) target = $region25
  $region24: #{textcnn_forward.1} parent=0 // pred_region
    _
  $region25: #{textcnn_forward.1} parent=0 // pred_fallthru
    _
  // Predicated region
  $region26: #{textcnn_forward.1} parent=0 // pred_check
    _
  $region27: #{textcnn_forward.1} parent=0 // pred_check_branch
    %1082 = sbr.rel (0) target = $region29
  $region28: #{textcnn_forward.1} parent=0 // pred_region
    _
  $region29: #{textcnn_forward.1} parent=0 // pred_fallthru
    _

</llo_original>
